<compile_context>
chip_gen: v7x
topology: tpu7x:2x2x1
jax: 0.10.0
libtpu: 0.0.40
codegen_flags: <defaults>
</compile_context>

<pallas_src>
import functools

import jax
import jax.numpy as jnp
from jax.experimental import pallas as pl
from jax.experimental.pallas import tpu as pltpu

LATENT_LIMIT = 10.0
# grad_clip (1000.0) only affects backward via register_hook -> forward no-op.

GROUP = 8  # batch rows packed into the lane dimension per "packed row"


def _encoder_meta_kernel(x_ref, w0_ref, b0_ref, w1_ref, b1_ref, out_ref, *,
                         matmul_dtype):
    # x_ref: (tg, GROUP*D) in the input dtype; cast in-kernel (free VPU work).
    x = x_ref[...].astype(matmul_dtype)

    # Layer 0: block-diagonal, pre-transposed weight -> standard (K,N) matmul.
    #   (tg, 8D) @ (8D, 8H) -> (tg, 8H), f32 accumulate, f32 epilogue.
    h = jnp.dot(x, w0_ref[...], preferred_element_type=jnp.float32)
    h = jnp.maximum(h + b0_ref[...], 0.0)

    # Layer 1: (tg, 8H) @ (8H, 8Z=128) -> lane-dense (tg, 128) output.
    z = jnp.dot(h.astype(matmul_dtype), w1_ref[...],
                preferred_element_type=jnp.float32)
    z = z + b1_ref[...]
    out_ref[...] = (jnp.tanh(z) * LATENT_LIMIT).astype(out_ref.dtype)


@functools.partial(
    jax.jit,
    static_argnames=("matmul_dtype", "out_dtype", "batch_tile",
                     "min_grid_steps"))
def encoder_meta_forward(net_in, net_params, *, matmul_dtype=jnp.bfloat16,
                         out_dtype=None, batch_tile=2048, min_grid_steps=2):
    """net_params = [W0 (H, D), b0 (H,), W1 (Z, H), b1 (Z,)] (PyTorch layout)."""
    w0, b0, w1, b1 = net_params
    B, D = net_in.shape
    H = w0.shape[0]
    Z = w1.shape[0]
    out_dtype = net_in.dtype if out_dtype is None else out_dtype

    # Pad B to a multiple of GROUP only when necessary (usually a no-op).
    Bp = ((B + GROUP - 1) // GROUP) * GROUP
    x = net_in
    if Bp != B:
        x = jnp.pad(x, ((0, Bp - B), (0, 0)))

    # Free row-major reshape (bitcast, no HBM copy): lane-dense x stream.
    G = Bp // GROUP
    x2 = x.reshape(G, GROUP * D)

    # One-time, KB-scale block-diagonal + pre-transposed weights (VMEM-resident
    # via constant index_maps; off-diagonal blocks are exact zeros, so the math
    # is identical to 8 independent per-row matmuls).
    eye = jnp.eye(GROUP, dtype=matmul_dtype)
    w0t = jnp.kron(eye, w0.T.astype(matmul_dtype))       # (8D, 8H)
    w1t = jnp.kron(eye, w1.T.astype(matmul_dtype))       # (8H, 8Z)
    b0t = jnp.tile(b0.astype(jnp.float32), GROUP).reshape(1, GROUP * H)
    b1t = jnp.tile(b1.astype(jnp.float32), GROUP).reshape(1, GROUP * Z)

    # Batch tile in packed rows: multiple of 8 sublanes unless it covers all of
    # G.  Keep >= min_grid_steps steps when possible (v7x dual-TC utilization).
    tg = min(max(batch_tile // GROUP, 8), G)
    if min_grid_steps > 1:
        tg = min(tg, pl.cdiv(G, min_grid_steps))
    if tg < G:
        tg = max(8, (tg // 8) * 8)
    tg = min(tg, G)
    grid = (pl.cdiv(G, tg),)

    kernel = functools.partial(_encoder_meta_kernel, matmul_dtype=matmul_dtype)

    out2 = pl.pallas_call(
        kernel,
        out_shape=jax.ShapeDtypeStruct((G, GROUP * Z), out_dtype),
        grid=grid,
        in_specs=[
            pl.BlockSpec((tg, GROUP * D), lambda i: (i, 0)),   # x2: streams
            pl.BlockSpec((GROUP * D, GROUP * H), lambda i: (0, 0)),  # W0 blockdiag
            pl.BlockSpec((1, GROUP * H), lambda i: (0, 0)),          # b0 tiled
            pl.BlockSpec((GROUP * H, GROUP * Z), lambda i: (0, 0)),  # W1 blockdiag
            pl.BlockSpec((1, GROUP * Z), lambda i: (0, 0)),          # b1 tiled
        ],
        out_specs=pl.BlockSpec((tg, GROUP * Z), lambda i: (i, 0)),
        compiler_params=pltpu.CompilerParams(
            dimension_semantics=("parallel",)),
    )(x2, w0t, b0t, w1t, b1t)

    # Free reshape back to (Bp, Z); slice off padding only if it was added.
    out = out2.reshape(Bp, Z)
    if Bp != B:
        out = out[:B]
    return out


def _reference_exact(x, params):
    w0, b0, w1, b1 = params
    h = jnp.maximum(x @ w0.T + b0, 0.0)
    return jnp.tanh(h @ w1.T + b1) * LATENT_LIMIT


def _reference_matched(x, params, matmul_dtype):
    """Same dtype policy as the kernel (bf16 matmul inputs, f32 accum/epilogue)."""
    w0, b0, w1, b1 = params
    h = jnp.dot(x.astype(matmul_dtype), w0.astype(matmul_dtype).T,
                preferred_element_type=jnp.float32) + b0
    h = jnp.maximum(h, 0.0)
    z = jnp.dot(h.astype(matmul_dtype), w1.astype(matmul_dtype).T,
                preferred_element_type=jnp.float32) + b1
    return jnp.tanh(z) * LATENT_LIMIT


if __name__ == "__main__":
    key = jax.random.PRNGKey(0)
    k_x, k_w0, k_b0, k_w1, k_b1 = jax.random.split(key, 5)

    # Small-but-gridded problem: feature dims as in the module's typical use;
    # B=256 with min_grid_steps=2 exercises a 2-step batch grid.
    B, D, H, Z = 256, 32, 64, 16
    x = jax.random.normal(k_x, (B, D), dtype=jnp.float32)
    w0 = jax.random.normal(k_w0, (H, D), dtype=jnp.float32) * 0.1
    b0 = jax.random.normal(k_b0, (H,), dtype=jnp.float32) * 0.1
    w1 = jax.random.normal(k_w1, (Z, H), dtype=jnp.float32) * 0.1
    b1 = jax.random.normal(k_b1, (Z,), dtype=jnp.float32) * 0.1
    params = [w0, b0, w1, b1]

    out = encoder_meta_forward(x, params, matmul_dtype=jnp.bfloat16,
                               batch_tile=2048, min_grid_steps=2)
    out = jax.block_until_ready(out)
    assert out.shape == (B, Z)

    # Tight check vs a reference using the same bf16-matmul / f32-epilogue policy.
    ref_m = _reference_matched(x, params, jnp.bfloat16)
    assert jnp.allclose(out, ref_m, atol=5e-3, rtol=5e-3), \
        "mismatch vs dtype-matched reference"

    # Loose semantic check vs the exact f32 PyTorch-equivalent reference
    # (tolerance relaxed because matmul inputs are bf16).
    ref_f32 = _reference_exact(x, params)
    assert jnp.allclose(out, ref_f32, atol=2e-1, rtol=5e-2), \
        "mismatch vs exact f32 reference"

    print("KERNEL_OK")
</pallas_src>

<mosaic_0001>
module attributes {stable_mosaic.version = 11 : i64} {
  func.func @_encoder_meta_kernel(%arg0: i32, %arg1: memref<16x256xf32, #tpu.memory_space<vmem>>, %arg2: memref<256x512xbf16, #tpu.memory_space<vmem>>, %arg3: memref<1x512xf32, #tpu.memory_space<vmem>>, %arg4: memref<512x128xbf16, #tpu.memory_space<vmem>>, %arg5: memref<1x128xf32, #tpu.memory_space<vmem>>, %arg6: memref<16x128xf32, #tpu.memory_space<vmem>>) attributes {dimension_semantics = [#tpu.dimension_semantics<parallel>], iteration_bounds = array<i64: 2>, scalar_prefetch = 0 : i64, scratch_operands = 0 : i64, tpu.core_type = #tpu.core_type<tc>, window_params = [{transform_indices = @transform_0, window_bounds = array<i64: 16, 256>}, {pipeline_mode = #tpu.pipeline_mode<synchronous>, transform_indices = @transform_1, window_bounds = array<i64: 256, 512>}, {pipeline_mode = #tpu.pipeline_mode<synchronous>, transform_indices = @transform_2, window_bounds = array<i64: 1, 512>}, {pipeline_mode = #tpu.pipeline_mode<synchronous>, transform_indices = @transform_3, window_bounds = array<i64: 512, 128>}, {pipeline_mode = #tpu.pipeline_mode<synchronous>, transform_indices = @transform_4, window_bounds = array<i64: 1, 128>}, {transform_indices = @transform_5, window_bounds = array<i64: 16, 128>}]} {
    %c0 = arith.constant 0 : index
    %c0_0 = arith.constant 0 : index
    %0 = vector.load %arg1[%c0, %c0_0] : memref<16x256xf32, #tpu.memory_space<vmem>>, vector<16x256xf32>
    %1 = arith.truncf %0 : vector<16x256xf32> to vector<16x256xbf16>
    %c0_1 = arith.constant 0 : index
    %c0_2 = arith.constant 0 : index
    %2 = vector.load %arg2[%c0_1, %c0_2] : memref<256x512xbf16, #tpu.memory_space<vmem>>, vector<256x512xbf16>
    %cst = arith.constant dense<0.000000e+00> : vector<16x512xf32>
    %3 = tpu.matmul %1, %2, %cst {dimension_numbers = #tpu.dot_dimension_numbers<[1], [0], [0], [1], [0, 0, 1, 1], [], []>} : vector<16x256xbf16>, vector<256x512xbf16>, vector<16x512xf32> -> vector<16x512xf32>
    %c0_3 = arith.constant 0 : index
    %c0_4 = arith.constant 0 : index
    %4 = vector.load %arg3[%c0_3, %c0_4] : memref<1x512xf32, #tpu.memory_space<vmem>>, vector<1x512xf32>
    %5 = vector.broadcast %4 : vector<1x512xf32> to vector<16x512xf32>
    %6 = arith.addf %3, %5 : vector<16x512xf32>
    %cst_5 = arith.constant 0.000000e+00 : f32
    %7 = vector.broadcast %cst_5 : f32 to vector<16x512xf32>
    %8 = arith.maximumf %6, %7 : vector<16x512xf32>
    %9 = arith.truncf %8 : vector<16x512xf32> to vector<16x512xbf16>
    %c0_6 = arith.constant 0 : index
    %c0_7 = arith.constant 0 : index
    %10 = vector.load %arg4[%c0_6, %c0_7] : memref<512x128xbf16, #tpu.memory_space<vmem>>, vector<512x128xbf16>
    %cst_8 = arith.constant dense<0.000000e+00> : vector<16x128xf32>
    %11 = tpu.matmul %9, %10, %cst_8 {dimension_numbers = #tpu.dot_dimension_numbers<[1], [0], [0], [1], [0, 0, 1, 1], [], []>} : vector<16x512xbf16>, vector<512x128xbf16>, vector<16x128xf32> -> vector<16x128xf32>
    %c0_9 = arith.constant 0 : index
    %c0_10 = arith.constant 0 : index
    %12 = vector.load %arg5[%c0_9, %c0_10] : memref<1x128xf32, #tpu.memory_space<vmem>>, vector<1x128xf32>
    %13 = vector.broadcast %12 : vector<1x128xf32> to vector<16x128xf32>
    %14 = arith.addf %11, %13 : vector<16x128xf32>
    %15 = math.tanh %14 : vector<16x128xf32>
    %cst_11 = arith.constant 1.000000e+01 : f32
    %16 = vector.broadcast %cst_11 : f32 to vector<16x128xf32>
    %17 = arith.mulf %15, %16 : vector<16x128xf32>
    %c0_12 = arith.constant 0 : index
    %c0_13 = arith.constant 0 : index
    %18 = vector.load %arg6[%c0_12, %c0_13] : memref<16x128xf32, #tpu.memory_space<vmem>>, vector<16x128xf32>
    tpu.vector_store %arg6[%c0_12, %c0_13], %17 {strides = array<i32>} : memref<16x128xf32, #tpu.memory_space<vmem>>, vector<16x128xf32>,
    return
  }
  func.func @transform_0(%arg0: i32) -> (i32, i32) {
    %c0_i32 = arith.constant 0 : i32
    %c0_i32_0 = arith.constant 0 : i32
    return %arg0, %c0_i32 : i32, i32
  }
  func.func @transform_1(%arg0: i32) -> (i32, i32) {
    %c0_i32 = arith.constant 0 : i32
    %c0_i32_0 = arith.constant 0 : i32
    %c0_i32_1 = arith.constant 0 : i32
    return %c0_i32, %c0_i32_0 : i32, i32
  }
  func.func @transform_2(%arg0: i32) -> (i32, i32) {
    %c0_i32 = arith.constant 0 : i32
    %c0_i32_0 = arith.constant 0 : i32
    %c0_i32_1 = arith.constant 0 : i32
    return %c0_i32, %c0_i32_0 : i32, i32
  }
  func.func @transform_3(%arg0: i32) -> (i32, i32) {
    %c0_i32 = arith.constant 0 : i32
    %c0_i32_0 = arith.constant 0 : i32
    %c0_i32_1 = arith.constant 0 : i32
    return %c0_i32, %c0_i32_0 : i32, i32
  }
  func.func @transform_4(%arg0: i32) -> (i32, i32) {
    %c0_i32 = arith.constant 0 : i32
    %c0_i32_0 = arith.constant 0 : i32
    %c0_i32_1 = arith.constant 0 : i32
    return %c0_i32, %c0_i32_0 : i32, i32
  }
  func.func @transform_5(%arg0: i32) -> (i32, i32) {
    %c0_i32 = arith.constant 0 : i32
    %c0_i32_0 = arith.constant 0 : i32
    return %arg0, %c0_i32 : i32, i32
  }
}

</mosaic_0001>

<llo_original>
// kernel: tile.13
$region0: #{tile.13}
  #allocation0 [shape = 's32[1]{0}', space=sflag, size = 0x4, scoped, tag = 'scoped memory for tile.13']
  %s0 = inlined_call_operand.vmem [shape: f32[64], index: 0, kind: input, shape index: {}]
  %s1 = inlined_call_operand.vmem [shape: f32[8,64], index: 1, kind: output, shape index: {}]
  // Predicated region
  $region2: #{tile.13} parent=0 // pred_check
    _
  $region3: #{tile.13} parent=0 // pred_check_branch
    %3 = sbr.rel (0) target = $region5
  $region4: #{tile.13} parent=0 // pred_region
    _
  $region5: #{tile.13} parent=0 // pred_fallthru
    _
  %v4 = vld [vmem:[%s0] ss:$0 sm:$0xff]
  %5 = vst [vmem:[%s1] sm:$0xff] %v4

// kernel: tile.14
$region0: #{tile.14}
  %s0 = inlined_call_operand.vmem [shape: f32[8,64], index: 0, kind: input, shape index: {}]
  %s1 = inlined_call_operand.vmem [shape: f32[1,512], index: 1, kind: output, shape index: {}]
  $region1: #{tile.14} parent=0
    #allocation0 [shape = 'u8[16384]{0}', space=vmem, size = 0x4000, scoped, tag = 'scoped mem for output reshape']
    %v2 = vld [vmem:[%s0] ss:$2 sm:$0xf]
    %vm3 = vcmask 523264
    %4 = vst.msk [vmem:[#allocation0] ss:$8 sm:$0xf] %vm3, %v2
    %s5 = scalar_lea.vmem %s0, 1
    %v6 = vld [vmem:[%s5] ss:$2 sm:$0xf]
    %7 = vrot.lane.b32.xlu0 %v6, 64
    %v8 = vpop.permute.xlu0 %7
    %vm9 = vcmask 1048064
    %10 = vst.msk [vmem:[#allocation0] ss:$8 sm:$0xf] %vm9, %v8
    %s12 = sshllo.u32 0, 1
    %v14 = vld [vmem:[#allocation0] sm:%s12]
    %s15 = sshllo.u32 0, 1
    %16 = vst [vmem:[%s1] sm:%s15] %v14
    %s17 = scalar_lea.vmem [#allocation0], 8
    %v18 = vld [vmem:[%s17] sm:%s12]
    %s19 = sshllo.u32 0, 1
    %s20 = scalar_lea.vmem %s1, 1
    %21 = vst [vmem:[%s20] sm:%s19] %v18
    %s22 = scalar_lea.vmem [#allocation0], 16
    %v23 = vld [vmem:[%s22] sm:%s12]
    %s24 = sshllo.u32 0, 1
    %s25 = smul.addr 1, 2
    %s26 = scalar_lea.vmem %s1, %s25
    %27 = vst [vmem:[%s26] sm:%s24] %v23
    %s28 = scalar_lea.vmem [#allocation0], 24
    %v29 = vld [vmem:[%s28] sm:%s12]
    %s30 = sshllo.u32 0, 1
    %s31 = smul.addr 1, 3
    %s32 = scalar_lea.vmem %s1, %s31
    %33 = vst [vmem:[%s32] sm:%s30] %v29

// kernel: tile.18
$region0: #{tile.18}
  #allocation0 [shape = 's32[1]{0}', space=sflag, size = 0x4, scoped, tag = 'scoped memory for tile.18']
  %s0 = inlined_call_operand.vmem [shape: f32[16], index: 0, kind: input, shape index: {}]
  %s1 = inlined_call_operand.vmem [shape: f32[8,16], index: 1, kind: output, shape index: {}]
  // Predicated region
  $region2: #{tile.18} parent=0 // pred_check
    _
  $region3: #{tile.18} parent=0 // pred_check_branch
    %3 = sbr.rel (0) target = $region5
  $region4: #{tile.18} parent=0 // pred_region
    _
  $region5: #{tile.18} parent=0 // pred_fallthru
    _
  %v4 = vld [vmem:[%s0] ss:$0 sm:$0xff]
  %5 = vst [vmem:[%s1] sm:$0xff] %v4

// kernel: tile.19
$region0: #{tile.19}
  %s0 = inlined_call_operand.vmem [shape: f32[8,16], index: 0, kind: input, shape index: {}]
  %s1 = inlined_call_operand.vmem [shape: f32[1,128], index: 1, kind: output, shape index: {}]
  $region1: #{tile.19} parent=0
    #allocation0 [shape = 'u8[4096]{0}', space=vmem, size = 0x1000, scoped, tag = 'scoped mem for output reshape']
    %v2 = vld [vmem:[%s0] sm:$0x1]
    %vm3 = vcmask 130048
    %4 = vst.msk [vmem:[#allocation0] sm:$0x1] %vm3, %v2
    %s5 = scalar_lea.vmem %s0, 7
    %v6 = vld [vmem:[%s5] sm:$0x1]
    %7 = vrot.lane.b32.xlu0 %v6, 112
    %v8 = vpop.permute.xlu0 %7
    %vm9 = vcmask 1048448
    %10 = vst.msk [vmem:[#allocation0] sm:$0x1] %vm9, %v8
    %s11 = scalar_lea.vmem %s0, 6
    %v12 = vld [vmem:[%s11] sm:$0x1]
    %13 = vrot.lane.b32.xlu0 %v12, 96
    %v14 = vpop.permute.xlu0 %13
    %vm15 = vcmask 917248
    %16 = vst.msk [vmem:[#allocation0] sm:$0x1] %vm15, %v14
    %s17 = scalar_lea.vmem %s0, 5
    %v18 = vld [vmem:[%s17] sm:$0x1]
    %19 = vrot.lane.b32.xlu0 %v18, 80
    %v20 = vpop.permute.xlu0 %19
    %vm21 = vcmask 786048
    %22 = vst.msk [vmem:[#allocation0] sm:$0x1] %vm21, %v20
    %s23 = scalar_lea.vmem %s0, 4
    %v24 = vld [vmem:[%s23] sm:$0x1]
    %25 = vrot.lane.b32.xlu0 %v24, 64
    %v26 = vpop.permute.xlu0 %25
    %vm27 = vcmask 654848
    %28 = vst.msk [vmem:[#allocation0] sm:$0x1] %vm27, %v26
    %s29 = scalar_lea.vmem %s0, 3
    %v30 = vld [vmem:[%s29] sm:$0x1]
    %31 = vrot.lane.b32.xlu0 %v30, 48
    %v32 = vpop.permute.xlu0 %31
    %vm33 = vcmask 523648
    %34 = vst.msk [vmem:[#allocation0] sm:$0x1] %vm33, %v32
    %s35 = scalar_lea.vmem %s0, 2
    %v36 = vld [vmem:[%s35] sm:$0x1]
    %37 = vrot.lane.b32.xlu0 %v36, 32
    %v38 = vpop.permute.xlu0 %37
    %vm39 = vcmask 392448
    %40 = vst.msk [vmem:[#allocation0] sm:$0x1] %vm39, %v38
    %s41 = scalar_lea.vmem %s0, 1
    %v42 = vld [vmem:[%s41] sm:$0x1]
    %43 = vrot.lane.b32.xlu0 %v42, 16
    %v44 = vpop.permute.xlu0 %43
    %vm45 = vcmask 261248
    %46 = vst.msk [vmem:[#allocation0] sm:$0x1] %vm45, %v44
    %s48 = sshllo.u32 0, 1
    %v50 = vld [vmem:[#allocation0] sm:%s48]
    %s51 = sshllo.u32 0, 1
    %52 = vst [vmem:[%s1] sm:%s51] %v50

// kernel: encoder_meta_forward.1
$region0: #{encoder_meta_forward.1}
  #allocation0 [shape = 'u32[]', space=smem, size = 0x4, offset = 0x4, fixed_abs, tag = 'smem constant byte address 0x4 - core index']
  #allocation1 [shape = 'u32[144,128]{1,0:T(1,128)}', space=vmem, size = 0x12000, scoped, tag = 'internal scratch']
  %s0 = inlined_call_operand.vmem [shape: f32[32,256], index: 0, kind: input, shape index: {}]
  %s1 = inlined_call_operand.vmem [shape: bf16[256,512], index: 1, kind: input, shape index: {}]
  %s2 = inlined_call_operand.vmem [shape: f32[1,512], index: 2, kind: input, shape index: {}]
  %s3 = inlined_call_operand.vmem [shape: bf16[512,128], index: 3, kind: input, shape index: {}]
  %s4 = inlined_call_operand.vmem [shape: f32[1,128], index: 4, kind: input, shape index: {}]
  %s5 = inlined_call_operand.vmem [shape: f32[32,128], index: 5, kind: output, shape index: {}]
  %s6 = sld [smem:[#allocation0]]
  $region53: #{encoder_meta_forward.1} parent=0
    _
  %s8 = ssub.s32 1, %s6
  %s9 = scalar_select 0, %s8, %s6
  loop: start=0, step=1, limit=4
  $region2: #{encoder_meta_forward.1} parent=0 // loop_pre_header
    _
  $region3: #{encoder_meta_forward.1} parent=0 // loop_header
    %s11 = sphi 0, %s15
    %p12 = scmp.ge.s32.totalorder %s11, 4
    %s21 = sphi 0, %s23
    %s24 = sphi 0, %s21
    %s25 = sphi 0, %s24
    %s41 = sphi 0, %s25
    %s45 = sphi 0, %s45
    %s47 = sphi 0, %s45
    %s48 = sphi 0, %s47
    %s62 = sphi 0, %s48
    %s66 = sphi 0, %s66
    %s68 = sphi 0, %s66
    %s69 = sphi 0, %s68
    %s83 = sphi 0, %s69
    %s87 = sphi 0, %s87
    %s89 = sphi 0, %s87
    %s90 = sphi 0, %s89
    %s104 = sphi 0, %s90
    %s108 = sphi 0, %s108
    %s110 = sphi 0, %s108
    %s111 = sphi 0, %s110
    %s125 = sphi 0, %s111
    %s131 = sphi 0, %s133
    %s134 = sphi 0, %s131
    %s135 = sphi 0, %s134
    %s151 = sphi 0, %s135
  $region4: #{encoder_meta_forward.1} parent=0 // loop_header_branch
    %14 = sbr.rel (%p12) target = $region8
  $region5: #{encoder_meta_forward.1} parent=0 // loop_body
    %s16 = ssub.s32 %s11, 1
    %s17 = ssub.s32 %s11, 2
    %s18 = sadd.s32 %s11, 1
    %s19 = ssub.s32 %s11, %s18
    %p20 = scmp.eq.s32.totalorder %s19, 0
    %s22 = sadd.s32 %s21, 1
    %s23 = scalar_select %p20, %s21, %s22
    %p26 = pneg %p20
    %p27 = scmp.eq.s32.totalorder %s11, 1
    %p28 = por %p26, %p27
    %p29 = scmp.ne.s32.totalorder %s21, %s24
    %p30 = scmp.eq.s32.totalorder %s11, 0
    %p31 = por %p29, %p30
    %p32 = scmp.ne.s32.totalorder %s21, %s24
    %p33 = scmp.eq.s32.totalorder %s16, 1
    %p34 = por %p32, %p33
    %p35 = scmp.ne.s32.totalorder %s24, %s25
    %p36 = scmp.eq.s32.totalorder %s16, 0
    %p37 = por %p35, %p36
    %p38 = scmp.ne.s32.totalorder %s24, %s25
    %p39 = scmp.eq.s32.totalorder %s17, 1
    %p40 = por %p38, %p39
    %p42 = scmp.ne.s32.totalorder %s25, %s41
    %p43 = scmp.eq.s32.totalorder %s17, 0
    %p44 = por %p42, %p43
    %s46 = sadd.s32 %s45, 1
    %p49 = scmp.eq.s32.totalorder %s11, 1
    %p50 = scmp.ne.s32.totalorder %s45, %s47
    %p51 = scmp.eq.s32.totalorder %s11, 0
    %p52 = por %p50, %p51
    %p53 = scmp.ne.s32.totalorder %s45, %s47
    %p54 = scmp.eq.s32.totalorder %s16, 1
    %p55 = por %p53, %p54
    %p56 = scmp.ne.s32.totalorder %s47, %s48
    %p57 = scmp.eq.s32.totalorder %s16, 0
    %p58 = por %p56, %p57
    %p59 = scmp.ne.s32.totalorder %s47, %s48
    %p60 = scmp.eq.s32.totalorder %s17, 1
    %p61 = por %p59, %p60
    %p63 = scmp.ne.s32.totalorder %s48, %s62
    %p64 = scmp.eq.s32.totalorder %s17, 0
    %p65 = por %p63, %p64
    %s67 = sadd.s32 %s66, 1
    %p70 = scmp.eq.s32.totalorder %s11, 1
    %p71 = scmp.ne.s32.totalorder %s66, %s68
    %p72 = scmp.eq.s32.totalorder %s11, 0
    %p73 = por %p71, %p72
    %p74 = scmp.ne.s32.totalorder %s66, %s68
    %p75 = scmp.eq.s32.totalorder %s16, 1
    %p76 = por %p74, %p75
    %p77 = scmp.ne.s32.totalorder %s68, %s69
    %p78 = scmp.eq.s32.totalorder %s16, 0
    %p79 = por %p77, %p78
    %p80 = scmp.ne.s32.totalorder %s68, %s69
    %p81 = scmp.eq.s32.totalorder %s17, 1
    %p82 = por %p80, %p81
    %p84 = scmp.ne.s32.totalorder %s69, %s83
    %p85 = scmp.eq.s32.totalorder %s17, 0
    %p86 = por %p84, %p85
    %s88 = sadd.s32 %s87, 1
    %p91 = scmp.eq.s32.totalorder %s11, 1
    %p92 = scmp.ne.s32.totalorder %s87, %s89
    %p93 = scmp.eq.s32.totalorder %s11, 0
    %p94 = por %p92, %p93
    %p95 = scmp.ne.s32.totalorder %s87, %s89
    %p96 = scmp.eq.s32.totalorder %s16, 1
    %p97 = por %p95, %p96
    %p98 = scmp.ne.s32.totalorder %s89, %s90
    %p99 = scmp.eq.s32.totalorder %s16, 0
    %p100 = por %p98, %p99
    %p101 = scmp.ne.s32.totalorder %s89, %s90
    %p102 = scmp.eq.s32.totalorder %s17, 1
    %p103 = por %p101, %p102
    %p105 = scmp.ne.s32.totalorder %s90, %s104
    %p106 = scmp.eq.s32.totalorder %s17, 0
    %p107 = por %p105, %p106
    %s109 = sadd.s32 %s108, 1
    %p112 = scmp.eq.s32.totalorder %s11, 1
    %p113 = scmp.ne.s32.totalorder %s108, %s110
    %p114 = scmp.eq.s32.totalorder %s11, 0
    %p115 = por %p113, %p114
    %p116 = scmp.ne.s32.totalorder %s108, %s110
    %p117 = scmp.eq.s32.totalorder %s16, 1
    %p118 = por %p116, %p117
    %p119 = scmp.ne.s32.totalorder %s110, %s111
    %p120 = scmp.eq.s32.totalorder %s16, 0
    %p121 = por %p119, %p120
    %p122 = scmp.ne.s32.totalorder %s110, %s111
    %p123 = scmp.eq.s32.totalorder %s17, 1
    %p124 = por %p122, %p123
    %p126 = scmp.ne.s32.totalorder %s111, %s125
    %p127 = scmp.eq.s32.totalorder %s17, 0
    %p128 = por %p126, %p127
    %s129 = ssub.s32 %s11, %s18
    %p130 = scmp.eq.s32.totalorder %s129, 0
    %s132 = sadd.s32 %s131, 1
    %s133 = scalar_select %p130, %s131, %s132
    %p136 = pneg %p130
    %p137 = scmp.eq.s32.totalorder %s11, 1
    %p138 = por %p136, %p137
    %p139 = scmp.ne.s32.totalorder %s131, %s134
    %p140 = scmp.eq.s32.totalorder %s11, 0
    %p141 = por %p139, %p140
    %p142 = scmp.ne.s32.totalorder %s131, %s134
    %p143 = scmp.eq.s32.totalorder %s16, 1
    %p144 = por %p142, %p143
    %p145 = scmp.ne.s32.totalorder %s134, %s135
    %p146 = scmp.eq.s32.totalorder %s16, 0
    %p147 = por %p145, %p146
    %p148 = scmp.ne.s32.totalorder %s134, %s135
    %p149 = scmp.eq.s32.totalorder %s17, 1
    %p150 = por %p148, %p149
    %p152 = scmp.ne.s32.totalorder %s135, %s151
    %p153 = scmp.eq.s32.totalorder %s17, 0
    %p154 = por %p152, %p153
    %p155 = scmp.le.s32.totalorder 1, %s11
    %p156 = scmp.lt.s32.totalorder %s11, 3
    %p157 = pnand %p155, %p156
    %p158 = pneg %p157
    // Predicated region
    $region9: #{encoder_meta_forward.1} parent=5 // pred_check
      _
    $region10: #{encoder_meta_forward.1} parent=5 // pred_check_branch
      %160 = sbr.rel (%p157) target = $region12
    $region11: #{encoder_meta_forward.1} parent=5 // pred_region
      %s161 = ssub.s32 %s11, 1
      // Predicated region
      $region13: #{encoder_meta_forward.1} parent=11 // pred_check
        %p162 = pneg %p58
      $region14: #{encoder_meta_forward.1} parent=11 // pred_check_branch
        %164 = sbr.rel (%p162) target = $region16
      $region15: #{encoder_meta_forward.1} parent=11 // pred_region
        _
      $region16: #{encoder_meta_forward.1} parent=11 // pred_fallthru
        _
      // Predicated region
      $region17: #{encoder_meta_forward.1} parent=11 // pred_check
        %p165 = pneg %p79
      $region18: #{encoder_meta_forward.1} parent=11 // pred_check_branch
        %167 = sbr.rel (%p165) target = $region20
      $region19: #{encoder_meta_forward.1} parent=11 // pred_region
        _
      $region20: #{encoder_meta_forward.1} parent=11 // pred_fallthru
        _
      // Predicated region
      $region21: #{encoder_meta_forward.1} parent=11 // pred_check
        %p168 = pneg %p100
      $region22: #{encoder_meta_forward.1} parent=11 // pred_check_branch
        %170 = sbr.rel (%p168) target = $region24
      $region23: #{encoder_meta_forward.1} parent=11 // pred_region
        _
      $region24: #{encoder_meta_forward.1} parent=11 // pred_fallthru
        _
      // Predicated region
      $region25: #{encoder_meta_forward.1} parent=11 // pred_check
        %p171 = pneg %p121
      $region26: #{encoder_meta_forward.1} parent=11 // pred_check_branch
        %173 = sbr.rel (%p171) target = $region28
      $region27: #{encoder_meta_forward.1} parent=11 // pred_region
        _
      $region28: #{encoder_meta_forward.1} parent=11 // pred_fallthru
        _
    $region12: #{encoder_meta_forward.1} parent=5 // pred_fallthru
      _
    %p174 = scmp.lt.s32.totalorder %s11, 2
    // Predicated region
    $region29: #{encoder_meta_forward.1} parent=5 // pred_check
      %p175 = pneg %p174
    $region30: #{encoder_meta_forward.1} parent=5 // pred_check_branch
      %177 = sbr.rel (%p175) target = $region32
    $region31: #{encoder_meta_forward.1} parent=5 // pred_region
      // Predicated region
      $region33: #{encoder_meta_forward.1} parent=31 // pred_check
        %p178 = pneg %p31
      $region34: #{encoder_meta_forward.1} parent=31 // pred_check_branch
        %180 = sbr.rel (%p178) target = $region36
      $region35: #{encoder_meta_forward.1} parent=31 // pred_region
        %s181 = smul.u32 2, %s11
        %p182 = scmp.lt.s32.totalorder %s181, 3
        %s183 = scalar_select %p182, %s181, 3
        %s184 = smul.addr %s183, 2
        %s185 = smul.addr %s184, 8
        %s186 = scalar_lea.vmem %s0, %s185
        %s187 = smul.u32 2, %s11
      $region36: #{encoder_meta_forward.1} parent=31 // pred_fallthru
        _
    $region32: #{encoder_meta_forward.1} parent=5 // pred_fallthru
      _
    %p188 = scmp.le.s32.totalorder 1, %s11
    %p189 = scmp.lt.s32.totalorder %s11, 3
    %p190 = pnand %p188, %p189
    %p191 = pneg %p190
    // Predicated region
    $region37: #{encoder_meta_forward.1} parent=5 // pred_check
      _
    $region38: #{encoder_meta_forward.1} parent=5 // pred_check_branch
      %193 = sbr.rel (%p190) target = $region40
    $region39: #{encoder_meta_forward.1} parent=5 // pred_region
      %s194 = ssub.s32 %s11, 1
      %s195 = smul.u32 2, %s16
      %p196 = scmp.lt.s32.totalorder %s195, 3
      %s197 = scalar_select %p196, %s195, 3
      %s198 = smul.addr %s197, 2
      %s199 = smul.addr %s198, 8
      %s200 = scalar_lea.vmem %s0, %s199
      %p201 = pneg %p37
      %p202 = pneg %p34
      %p203 = pneg %p58
      %p204 = pneg %p55
      %p205 = pneg %p79
      %p206 = pneg %p76
      %p207 = pneg %p100
      %p208 = pneg %p97
      %p209 = pneg %p121
      %p210 = pneg %p118
      %p211 = pneg %p147
      %p212 = pneg %p144
      %s213 = smul.u32 2, %s16
      %p214 = scmp.lt.s32.totalorder %s213, 3
      %s215 = scalar_select %p214, %s213, 3
      %s216 = smul.addr %s215, 8
      %s217 = scalar_lea.vmem %s5, %s216
      %s218 = smul.u32 2, %s16
      %p219 = scmp.lt.s32.totalorder %s218, 3
      %s220 = scalar_select %p219, %s218, 3
      %s221 = smul.addr %s220, 2
      %s222 = smul.addr %s221, 8
      %s223 = scalar_lea.vmem %s0, %s222
      %s224 = smul.u32 2, %s16
      %s225 = smul.u32 2, %s16
      %p226 = scmp.lt.s32.totalorder %s225, 3
      %s227 = scalar_select %p226, %s225, 3
      %s228 = smul.addr %s227, 8
      %s229 = scalar_lea.vmem %s5, %s228
      %s230 = smul.u32 2, %s16
      %v232 = vld [vmem:[%s223] sm:$0xff]
      %v233 = vld [vmem:[%s223 + $0x8] sm:$0xff]
      %v234 = vld [vmem:[%s223 + $0x10] sm:$0xff]
      %v235 = vld [vmem:[%s223 + $0x18] sm:$0xff]
      %v236 = vpack.c.bf16 %v234, %v232
      %v237 = vpack.c.bf16 %v235, %v233
      %v238 = vld [vmem:[%s1] sm:$0xff]
      %v239 = vld [vmem:[%s1 + $0x8] sm:$0xff]
      %v240 = vld [vmem:[%s1 + $0x10] sm:$0xff]
      %v241 = vld [vmem:[%s1 + $0x18] sm:$0xff]
      %v242 = vld [vmem:[%s1 + $0x20] sm:$0xff]
      %v243 = vld [vmem:[%s1 + $0x28] sm:$0xff]
      %v244 = vld [vmem:[%s1 + $0x30] sm:$0xff]
      %v245 = vld [vmem:[%s1 + $0x38] sm:$0xff]
      %v246 = vld [vmem:[%s1 + $0x40] sm:$0xff]
      %v247 = vld [vmem:[%s1 + $0x48] sm:$0xff]
      %v248 = vld [vmem:[%s1 + $0x50] sm:$0xff]
      %v249 = vld [vmem:[%s1 + $0x58] sm:$0xff]
      %v250 = vld [vmem:[%s1 + $0x60] sm:$0xff]
      %v251 = vld [vmem:[%s1 + $0x68] sm:$0xff]
      %v252 = vld [vmem:[%s1 + $0x70] sm:$0xff]
      %v253 = vld [vmem:[%s1 + $0x78] sm:$0xff]
      %v254 = vld [vmem:[%s1 + $0x80] sm:$0xff]
      %v255 = vld [vmem:[%s1 + $0x88] sm:$0xff]
      %v256 = vld [vmem:[%s1 + $0x90] sm:$0xff]
      %v257 = vld [vmem:[%s1 + $0x98] sm:$0xff]
      %v258 = vld [vmem:[%s1 + $0xa0] sm:$0xff]
      %v259 = vld [vmem:[%s1 + $0xa8] sm:$0xff]
      %v260 = vld [vmem:[%s1 + $0xb0] sm:$0xff]
      %v261 = vld [vmem:[%s1 + $0xb8] sm:$0xff]
      %v262 = vld [vmem:[%s1 + $0xc0] sm:$0xff]
      %v263 = vld [vmem:[%s1 + $0xc8] sm:$0xff]
      %v264 = vld [vmem:[%s1 + $0xd0] sm:$0xff]
      %v265 = vld [vmem:[%s1 + $0xd8] sm:$0xff]
      %v266 = vld [vmem:[%s1 + $0xe0] sm:$0xff]
      %v267 = vld [vmem:[%s1 + $0xe8] sm:$0xff]
      %v268 = vld [vmem:[%s1 + $0xf0] sm:$0xff]
      %v269 = vld [vmem:[%s1 + $0xf8] sm:$0xff]
      %v270 = vld [vmem:[%s1 + $0x100] sm:$0xff]
      %v271 = vld [vmem:[%s1 + $0x108] sm:$0xff]
      %v272 = vld [vmem:[%s1 + $0x110] sm:$0xff]
      %v273 = vld [vmem:[%s1 + $0x118] sm:$0xff]
      %v274 = vld [vmem:[%s1 + $0x120] sm:$0xff]
      %v275 = vld [vmem:[%s1 + $0x128] sm:$0xff]
      %v276 = vld [vmem:[%s1 + $0x130] sm:$0xff]
      %v277 = vld [vmem:[%s1 + $0x138] sm:$0xff]
      %v278 = vld [vmem:[%s1 + $0x140] sm:$0xff]
      %v279 = vld [vmem:[%s1 + $0x148] sm:$0xff]
      %v280 = vld [vmem:[%s1 + $0x150] sm:$0xff]
      %v281 = vld [vmem:[%s1 + $0x158] sm:$0xff]
      %v282 = vld [vmem:[%s1 + $0x160] sm:$0xff]
      %v283 = vld [vmem:[%s1 + $0x168] sm:$0xff]
      %v284 = vld [vmem:[%s1 + $0x170] sm:$0xff]
      %v285 = vld [vmem:[%s1 + $0x178] sm:$0xff]
      %v286 = vld [vmem:[%s1 + $0x180] sm:$0xff]
      %v287 = vld [vmem:[%s1 + $0x188] sm:$0xff]
      %v288 = vld [vmem:[%s1 + $0x190] sm:$0xff]
      %v289 = vld [vmem:[%s1 + $0x198] sm:$0xff]
      %v290 = vld [vmem:[%s1 + $0x1a0] sm:$0xff]
      %v291 = vld [vmem:[%s1 + $0x1a8] sm:$0xff]
      %v292 = vld [vmem:[%s1 + $0x1b0] sm:$0xff]
      %v293 = vld [vmem:[%s1 + $0x1b8] sm:$0xff]
      %v294 = vld [vmem:[%s1 + $0x1c0] sm:$0xff]
      %v295 = vld [vmem:[%s1 + $0x1c8] sm:$0xff]
      %v296 = vld [vmem:[%s1 + $0x1d0] sm:$0xff]
      %v297 = vld [vmem:[%s1 + $0x1d8] sm:$0xff]
      %v298 = vld [vmem:[%s1 + $0x1e0] sm:$0xff]
      %v299 = vld [vmem:[%s1 + $0x1e8] sm:$0xff]
      %v300 = vld [vmem:[%s1 + $0x1f0] sm:$0xff]
      %v301 = vld [vmem:[%s1 + $0x1f8] sm:$0xff]
      %v302 = vld [vmem:[%s2] sm:$0xf]
      %v304 = vlaneseq
      %v305 = vshrl.u32 %v304, 7
      %v306 = vsub.s32 0, %v305
      %v307 = vrot.slane %v302, %v306
      %v308 = vlaneseq
      %v309 = vshrl.u32 %v308, 7
      %v310 = vsub.s32 1, %v309
      %v311 = vrot.slane %v302, %v310
      %v312 = vlaneseq
      %v313 = vshrl.u32 %v312, 7
      %v314 = vsub.s32 2, %v313
      %v315 = vrot.slane %v302, %v314
      %v316 = vlaneseq
      %v317 = vshrl.u32 %v316, 7
      %v318 = vsub.s32 3, %v317
      %v319 = vrot.slane %v302, %v318
      %v388 = vunpack.c.l.b16 %v238
      %v389 = vunpack.c.h.b16 %v238
      %v390 = vunpack.c.l.b16 %v239
      %v391 = vunpack.c.h.b16 %v239
      %v392 = vunpack.c.l.b16 %v240
      %v393 = vunpack.c.h.b16 %v240
      %v394 = vunpack.c.l.b16 %v241
      %v395 = vunpack.c.h.b16 %v241
      %v396 = vunpack.c.l.b16 %v242
      %v397 = vunpack.c.h.b16 %v242
      %v398 = vunpack.c.l.b16 %v243
      %v399 = vunpack.c.h.b16 %v243
      %v400 = vunpack.c.l.b16 %v244
      %v401 = vunpack.c.h.b16 %v244
      %v402 = vunpack.c.l.b16 %v245
      %v403 = vunpack.c.h.b16 %v245
      %v404 = vunpack.c.l.b16 %v246
      %v405 = vunpack.c.h.b16 %v246
      %v406 = vunpack.c.l.b16 %v247
      %v407 = vunpack.c.h.b16 %v247
      %v408 = vunpack.c.l.b16 %v248
      %v409 = vunpack.c.h.b16 %v248
      %v410 = vunpack.c.l.b16 %v249
      %v411 = vunpack.c.h.b16 %v249
      %v412 = vunpack.c.l.b16 %v250
      %v413 = vunpack.c.h.b16 %v250
      %v414 = vunpack.c.l.b16 %v251
      %v415 = vunpack.c.h.b16 %v251
      %v416 = vunpack.c.l.b16 %v252
      %v417 = vunpack.c.h.b16 %v252
      %v418 = vunpack.c.l.b16 %v253
      %v419 = vunpack.c.h.b16 %v253
      %v420 = vunpack.c.l.b16 %v254
      %v421 = vunpack.c.h.b16 %v254
      %v422 = vunpack.c.l.b16 %v255
      %v423 = vunpack.c.h.b16 %v255
      %v424 = vunpack.c.l.b16 %v256
      %v425 = vunpack.c.h.b16 %v256
      %v426 = vunpack.c.l.b16 %v257
      %v427 = vunpack.c.h.b16 %v257
      %v428 = vunpack.c.l.b16 %v258
      %v429 = vunpack.c.h.b16 %v258
      %v430 = vunpack.c.l.b16 %v259
      %v431 = vunpack.c.h.b16 %v259
      %v432 = vunpack.c.l.b16 %v260
      %v433 = vunpack.c.h.b16 %v260
      %v434 = vunpack.c.l.b16 %v261
      %v435 = vunpack.c.h.b16 %v261
      %v436 = vunpack.c.l.b16 %v262
      %v437 = vunpack.c.h.b16 %v262
      %v438 = vunpack.c.l.b16 %v263
      %v439 = vunpack.c.h.b16 %v263
      %v440 = vunpack.c.l.b16 %v264
      %v441 = vunpack.c.h.b16 %v264
      %v442 = vunpack.c.l.b16 %v265
      %v443 = vunpack.c.h.b16 %v265
      %v444 = vunpack.c.l.b16 %v266
      %v445 = vunpack.c.h.b16 %v266
      %v446 = vunpack.c.l.b16 %v267
      %v447 = vunpack.c.h.b16 %v267
      %v448 = vunpack.c.l.b16 %v268
      %v449 = vunpack.c.h.b16 %v268
      %v450 = vunpack.c.l.b16 %v269
      %v451 = vunpack.c.h.b16 %v269
      %v452 = vunpack.c.l.b16 %v270
      %v453 = vunpack.c.h.b16 %v270
      %v454 = vunpack.c.l.b16 %v271
      %v455 = vunpack.c.h.b16 %v271
      %v456 = vunpack.c.l.b16 %v272
      %v457 = vunpack.c.h.b16 %v272
      %v458 = vunpack.c.l.b16 %v273
      %v459 = vunpack.c.h.b16 %v273
      %v460 = vunpack.c.l.b16 %v274
      %v461 = vunpack.c.h.b16 %v274
      %v462 = vunpack.c.l.b16 %v275
      %v463 = vunpack.c.h.b16 %v275
      %v464 = vunpack.c.l.b16 %v276
      %v465 = vunpack.c.h.b16 %v276
      %v466 = vunpack.c.l.b16 %v277
      %v467 = vunpack.c.h.b16 %v277
      %v468 = vunpack.c.l.b16 %v278
      %v469 = vunpack.c.h.b16 %v278
      %v470 = vunpack.c.l.b16 %v279
      %v471 = vunpack.c.h.b16 %v279
      %v472 = vunpack.c.l.b16 %v280
      %v473 = vunpack.c.h.b16 %v280
      %v474 = vunpack.c.l.b16 %v281
      %v475 = vunpack.c.h.b16 %v281
      %v476 = vunpack.c.l.b16 %v282
      %v477 = vunpack.c.h.b16 %v282
      %v478 = vunpack.c.l.b16 %v283
      %v479 = vunpack.c.h.b16 %v283
      %v480 = vunpack.c.l.b16 %v284
      %v481 = vunpack.c.h.b16 %v284
      %v482 = vunpack.c.l.b16 %v285
      %v483 = vunpack.c.h.b16 %v285
      %v484 = vunpack.c.l.b16 %v286
      %v485 = vunpack.c.h.b16 %v286
      %v486 = vunpack.c.l.b16 %v287
      %v487 = vunpack.c.h.b16 %v287
      %v488 = vunpack.c.l.b16 %v288
      %v489 = vunpack.c.h.b16 %v288
      %v490 = vunpack.c.l.b16 %v289
      %v491 = vunpack.c.h.b16 %v289
      %v492 = vunpack.c.l.b16 %v290
      %v493 = vunpack.c.h.b16 %v290
      %v494 = vunpack.c.l.b16 %v291
      %v495 = vunpack.c.h.b16 %v291
      %v496 = vunpack.c.l.b16 %v292
      %v497 = vunpack.c.h.b16 %v292
      %v498 = vunpack.c.l.b16 %v293
      %v499 = vunpack.c.h.b16 %v293
      %v500 = vunpack.c.l.b16 %v294
      %v501 = vunpack.c.h.b16 %v294
      %v502 = vunpack.c.l.b16 %v295
      %v503 = vunpack.c.h.b16 %v295
      %v504 = vunpack.c.l.b16 %v296
      %v505 = vunpack.c.h.b16 %v296
      %v506 = vunpack.c.l.b16 %v297
      %v507 = vunpack.c.h.b16 %v297
      %v508 = vunpack.c.l.b16 %v298
      %v509 = vunpack.c.h.b16 %v298
      %v510 = vunpack.c.l.b16 %v299
      %v511 = vunpack.c.h.b16 %v299
      %v512 = vunpack.c.l.b16 %v300
      %v513 = vunpack.c.h.b16 %v300
      %v514 = vunpack.c.l.b16 %v301
      %v515 = vunpack.c.h.b16 %v301
      %v516 = vpack.c.b16 %v392, %v388
      %v517 = vpack.c.b16 %v393, %v389
      %v518 = vpack.c.b16 %v394, %v390
      %v519 = vpack.c.b16 %v395, %v391
      %v520 = vpack.c.b16 %v400, %v396
      %v521 = vpack.c.b16 %v401, %v397
      %v522 = vpack.c.b16 %v402, %v398
      %v523 = vpack.c.b16 %v403, %v399
      %v524 = vpack.c.b16 %v408, %v404
      %v525 = vpack.c.b16 %v409, %v405
      %v526 = vpack.c.b16 %v410, %v406
      %v527 = vpack.c.b16 %v411, %v407
      %v528 = vpack.c.b16 %v416, %v412
      %v529 = vpack.c.b16 %v417, %v413
      %v530 = vpack.c.b16 %v418, %v414
      %v531 = vpack.c.b16 %v419, %v415
      %v532 = vpack.c.b16 %v424, %v420
      %v533 = vpack.c.b16 %v425, %v421
      %v534 = vpack.c.b16 %v426, %v422
      %v535 = vpack.c.b16 %v427, %v423
      %v536 = vpack.c.b16 %v432, %v428
      %v537 = vpack.c.b16 %v433, %v429
      %v538 = vpack.c.b16 %v434, %v430
      %v539 = vpack.c.b16 %v435, %v431
      %v540 = vpack.c.b16 %v440, %v436
      %v541 = vpack.c.b16 %v441, %v437
      %v542 = vpack.c.b16 %v442, %v438
      %v543 = vpack.c.b16 %v443, %v439
      %v544 = vpack.c.b16 %v448, %v444
      %v545 = vpack.c.b16 %v449, %v445
      %v546 = vpack.c.b16 %v450, %v446
      %v547 = vpack.c.b16 %v451, %v447
      %v548 = vpack.c.b16 %v456, %v452
      %v549 = vpack.c.b16 %v457, %v453
      %v550 = vpack.c.b16 %v458, %v454
      %v551 = vpack.c.b16 %v459, %v455
      %v552 = vpack.c.b16 %v464, %v460
      %v553 = vpack.c.b16 %v465, %v461
      %v554 = vpack.c.b16 %v466, %v462
      %v555 = vpack.c.b16 %v467, %v463
      %v556 = vpack.c.b16 %v472, %v468
      %v557 = vpack.c.b16 %v473, %v469
      %v558 = vpack.c.b16 %v474, %v470
      %v559 = vpack.c.b16 %v475, %v471
      %v560 = vpack.c.b16 %v480, %v476
      %v561 = vpack.c.b16 %v481, %v477
      %v562 = vpack.c.b16 %v482, %v478
      %v563 = vpack.c.b16 %v483, %v479
      %v564 = vpack.c.b16 %v488, %v484
      %v565 = vpack.c.b16 %v489, %v485
      %v566 = vpack.c.b16 %v490, %v486
      %v567 = vpack.c.b16 %v491, %v487
      %v568 = vpack.c.b16 %v496, %v492
      %v569 = vpack.c.b16 %v497, %v493
      %v570 = vpack.c.b16 %v498, %v494
      %v571 = vpack.c.b16 %v499, %v495
      %v572 = vpack.c.b16 %v504, %v500
      %v573 = vpack.c.b16 %v505, %v501
      %v574 = vpack.c.b16 %v506, %v502
      %v575 = vpack.c.b16 %v507, %v503
      %v576 = vpack.c.b16 %v512, %v508
      %v577 = vpack.c.b16 %v513, %v509
      %v578 = vpack.c.b16 %v514, %v510
      %v579 = vpack.c.b16 %v515, %v511
      %644 = vmatprep.subr.bf16.mxu0 %v517
      %645 = vmatpush1.bf16.msra.mxu0 %v516
      %646 = vmatprep.subr.bf16.mxu0 %v521
      %647 = vmatpush1.bf16.msra.mxu0 %v520
      %648 = vmatprep.subr.bf16.mxu0 %v525
      %649 = vmatpush1.bf16.msra.mxu0 %v524
      %650 = vmatprep.subr.bf16.mxu0 %v529
      %651 = vmatpush1.bf16.msra.mxu0 %v528
      %652 = vmatprep.subr.bf16.mxu0 %v533
      %653 = vmatpush1.bf16.msra.mxu0 %v532
      %654 = vmatprep.subr.bf16.mxu0 %v537
      %655 = vmatpush1.bf16.msra.mxu0 %v536
      %656 = vmatprep.subr.bf16.mxu0 %v541
      %657 = vmatpush1.bf16.msra.mxu0 %v540
      %658 = vmatprep.subr.bf16.mxu0 %v545
      %659 = vmatpush1.bf16.msra.mxu0 %v544
      %660 = vmatprep.subr.bf16.mxu0 %v549
      %661 = vmatpush1.bf16.msra.mxu0 %v548
      %662 = vmatprep.subr.bf16.mxu0 %v553
      %663 = vmatpush1.bf16.msra.mxu0 %v552
      %664 = vmatprep.subr.bf16.mxu0 %v557
      %665 = vmatpush1.bf16.msra.mxu0 %v556
      %666 = vmatprep.subr.bf16.mxu0 %v561
      %667 = vmatpush1.bf16.msra.mxu0 %v560
      %668 = vmatprep.subr.bf16.mxu0 %v565
      %669 = vmatpush1.bf16.msra.mxu0 %v564
      %670 = vmatprep.subr.bf16.mxu0 %v569
      %671 = vmatpush1.bf16.msra.mxu0 %v568
      %672 = vmatprep.subr.bf16.mxu0 %v573
      %673 = vmatpush1.bf16.msra.mxu0 %v572
      %674 = vmatprep.subr.bf16.mxu0 %v577
      %675 = vmatpush1.bf16.msra.mxu0 %v576
      %676 = vmatprep.mubr.bf16.mxu0 %v237
      %677 = vmatmul.mubr.bf16.gmra.mrb[0].mxu0 %v236
      %v678 = vpop.f32.mrb[0].mxu0
      %v679 = vadd.f32 %v307, %v678
      %v680 = vpop.f32.mrb[0].mxu0
      %v681 = vadd.f32 %v311, %v680
      %v682 = vpop.f32.mrb[0].mxu0
      %v683 = vadd.f32 %v307, %v682
      %v684 = vpop.f32.mrb[0].mxu0
      %v685 = vadd.f32 %v311, %v684
      %686 = vdwg.mxu0
      %687 = vmatprep.subr.bf16.mxu0 %v519
      %688 = vmatpush1.bf16.msra.mxu0 %v518
      %689 = vmatprep.subr.bf16.mxu0 %v523
      %690 = vmatpush1.bf16.msra.mxu0 %v522
      %691 = vmatprep.subr.bf16.mxu0 %v527
      %692 = vmatpush1.bf16.msra.mxu0 %v526
      %693 = vmatprep.subr.bf16.mxu0 %v531
      %694 = vmatpush1.bf16.msra.mxu0 %v530
      %695 = vmatprep.subr.bf16.mxu0 %v535
      %696 = vmatpush1.bf16.msra.mxu0 %v534
      %697 = vmatprep.subr.bf16.mxu0 %v539
      %698 = vmatpush1.bf16.msra.mxu0 %v538
      %699 = vmatprep.subr.bf16.mxu0 %v543
      %700 = vmatpush1.bf16.msra.mxu0 %v542
      %701 = vmatprep.subr.bf16.mxu0 %v547
      %702 = vmatpush1.bf16.msra.mxu0 %v546
      %703 = vmatprep.subr.bf16.mxu0 %v551
      %704 = vmatpush1.bf16.msra.mxu0 %v550
      %705 = vmatprep.subr.bf16.mxu0 %v555
      %706 = vmatpush1.bf16.msra.mxu0 %v554
      %707 = vmatprep.subr.bf16.mxu0 %v559
      %708 = vmatpush1.bf16.msra.mxu0 %v558
      %709 = vmatprep.subr.bf16.mxu0 %v563
      %710 = vmatpush1.bf16.msra.mxu0 %v562
      %711 = vmatprep.subr.bf16.mxu0 %v567
      %712 = vmatpush1.bf16.msra.mxu0 %v566
      %713 = vmatprep.subr.bf16.mxu0 %v571
      %714 = vmatpush1.bf16.msra.mxu0 %v570
      %715 = vmatprep.subr.bf16.mxu0 %v575
      %716 = vmatpush1.bf16.msra.mxu0 %v574
      %717 = vmatprep.subr.bf16.mxu0 %v579
      %718 = vmatpush1.bf16.msra.mxu0 %v578
      %719 = vmatprep.mubr.bf16.mxu0 %v237
      %720 = vmatmul.mubr.bf16.gmra.mrb[0].mxu0 %v236
      %v721 = vpop.f32.mrb[0].mxu0
      %v722 = vadd.f32 %v315, %v721
      %v723 = vpop.f32.mrb[0].mxu0
      %v724 = vadd.f32 %v319, %v723
      %v725 = vpop.f32.mrb[0].mxu0
      %v726 = vadd.f32 %v315, %v725
      %v727 = vpop.f32.mrb[0].mxu0
      %v728 = vadd.f32 %v319, %v727
      %729 = vdwg.mxu0
      %v730 = vmax.f32 %v679, 0.0
      %v731 = vmax.f32 %v681, 0.0
      %v732 = vmax.f32 %v722, 0.0
      %v733 = vmax.f32 %v724, 0.0
      %v734 = vmax.f32 %v683, 0.0
      %v735 = vmax.f32 %v685, 0.0
      %v736 = vmax.f32 %v726, 0.0
      %v737 = vmax.f32 %v728, 0.0
      %v738 = vpack.c.bf16 %v734, %v730
      %v739 = vpack.c.bf16 %v735, %v731
      %v740 = vpack.c.bf16 %v736, %v732
      %v741 = vpack.c.bf16 %v737, %v733
      %v742 = vld [vmem:[%s3] sm:$0xf]
      %v743 = vld [vmem:[%s3 + $0x4] sm:$0xf]
      %v744 = vld [vmem:[%s3 + $0x8] sm:$0xf]
      %v745 = vld [vmem:[%s3 + $0xc] sm:$0xf]
      %v746 = vld [vmem:[%s3 + $0x10] sm:$0xf]
      %v747 = vld [vmem:[%s3 + $0x14] sm:$0xf]
      %v748 = vld [vmem:[%s3 + $0x18] sm:$0xf]
      %v749 = vld [vmem:[%s3 + $0x1c] sm:$0xf]
      %v750 = vld [vmem:[%s3 + $0x20] sm:$0xf]
      %v751 = vld [vmem:[%s3 + $0x24] sm:$0xf]
      %v752 = vld [vmem:[%s3 + $0x28] sm:$0xf]
      %v753 = vld [vmem:[%s3 + $0x2c] sm:$0xf]
      %v754 = vld [vmem:[%s3 + $0x30] sm:$0xf]
      %v755 = vld [vmem:[%s3 + $0x34] sm:$0xf]
      %v756 = vld [vmem:[%s3 + $0x38] sm:$0xf]
      %v757 = vld [vmem:[%s3 + $0x3c] sm:$0xf]
      %v758 = vld [vmem:[%s3 + $0x40] sm:$0xf]
      %v759 = vld [vmem:[%s3 + $0x44] sm:$0xf]
      %v760 = vld [vmem:[%s3 + $0x48] sm:$0xf]
      %v761 = vld [vmem:[%s3 + $0x4c] sm:$0xf]
      %v762 = vld [vmem:[%s3 + $0x50] sm:$0xf]
      %v763 = vld [vmem:[%s3 + $0x54] sm:$0xf]
      %v764 = vld [vmem:[%s3 + $0x58] sm:$0xf]
      %v765 = vld [vmem:[%s3 + $0x5c] sm:$0xf]
      %v766 = vld [vmem:[%s3 + $0x60] sm:$0xf]
      %v767 = vld [vmem:[%s3 + $0x64] sm:$0xf]
      %v768 = vld [vmem:[%s3 + $0x68] sm:$0xf]
      %v769 = vld [vmem:[%s3 + $0x6c] sm:$0xf]
      %v770 = vld [vmem:[%s3 + $0x70] sm:$0xf]
      %v771 = vld [vmem:[%s3 + $0x74] sm:$0xf]
      %v772 = vld [vmem:[%s3 + $0x78] sm:$0xf]
      %v773 = vld [vmem:[%s3 + $0x7c] sm:$0xf]
      %v774 = vld [vmem:[%s3 + $0x80] sm:$0xf]
      %v775 = vld [vmem:[%s3 + $0x84] sm:$0xf]
      %v776 = vld [vmem:[%s3 + $0x88] sm:$0xf]
      %v777 = vld [vmem:[%s3 + $0x8c] sm:$0xf]
      %v778 = vld [vmem:[%s3 + $0x90] sm:$0xf]
      %v779 = vld [vmem:[%s3 + $0x94] sm:$0xf]
      %v780 = vld [vmem:[%s3 + $0x98] sm:$0xf]
      %v781 = vld [vmem:[%s3 + $0x9c] sm:$0xf]
      %v782 = vld [vmem:[%s3 + $0xa0] sm:$0xf]
      %v783 = vld [vmem:[%s3 + $0xa4] sm:$0xf]
      %v784 = vld [vmem:[%s3 + $0xa8] sm:$0xf]
      %v785 = vld [vmem:[%s3 + $0xac] sm:$0xf]
      %v786 = vld [vmem:[%s3 + $0xb0] sm:$0xf]
      %v787 = vld [vmem:[%s3 + $0xb4] sm:$0xf]
      %v788 = vld [vmem:[%s3 + $0xb8] sm:$0xf]
      %v789 = vld [vmem:[%s3 + $0xbc] sm:$0xf]
      %v790 = vld [vmem:[%s3 + $0xc0] sm:$0xf]
      %v791 = vld [vmem:[%s3 + $0xc4] sm:$0xf]
      %v792 = vld [vmem:[%s3 + $0xc8] sm:$0xf]
      %v793 = vld [vmem:[%s3 + $0xcc] sm:$0xf]
      %v794 = vld [vmem:[%s3 + $0xd0] sm:$0xf]
      %v795 = vld [vmem:[%s3 + $0xd4] sm:$0xf]
      %v796 = vld [vmem:[%s3 + $0xd8] sm:$0xf]
      %v797 = vld [vmem:[%s3 + $0xdc] sm:$0xf]
      %v798 = vld [vmem:[%s3 + $0xe0] sm:$0xf]
      %v799 = vld [vmem:[%s3 + $0xe4] sm:$0xf]
      %v800 = vld [vmem:[%s3 + $0xe8] sm:$0xf]
      %v801 = vld [vmem:[%s3 + $0xec] sm:$0xf]
      %v802 = vld [vmem:[%s3 + $0xf0] sm:$0xf]
      %v803 = vld [vmem:[%s3 + $0xf4] sm:$0xf]
      %v804 = vld [vmem:[%s3 + $0xf8] sm:$0xf]
      %v805 = vld [vmem:[%s3 + $0xfc] sm:$0xf]
      %v806 = vld [vmem:[%s4] sm:$0x1]
      %v808 = vlaneseq
      %v809 = vshrl.u32 %v808, 7
      %v810 = vsub.s32 0, %v809
      %v811 = vrot.slane %v806, %v810
      %v877 = vunpack.c.l.b16 %v742
      %v878 = vunpack.c.l.b16 %v743
      %v879 = vunpack.c.l.b16 %v744
      %v880 = vunpack.c.l.b16 %v745
      %v881 = vunpack.c.l.b16 %v746
      %v882 = vunpack.c.l.b16 %v747
      %v883 = vunpack.c.l.b16 %v748
      %v884 = vunpack.c.l.b16 %v749
      %v885 = vunpack.c.l.b16 %v750
      %v886 = vunpack.c.l.b16 %v751
      %v887 = vunpack.c.l.b16 %v752
      %v888 = vunpack.c.l.b16 %v753
      %v889 = vunpack.c.l.b16 %v754
      %v890 = vunpack.c.l.b16 %v755
      %v891 = vunpack.c.l.b16 %v756
      %v892 = vunpack.c.l.b16 %v757
      %v893 = vunpack.c.l.b16 %v758
      %v894 = vunpack.c.l.b16 %v759
      %v895 = vunpack.c.l.b16 %v760
      %v896 = vunpack.c.l.b16 %v761
      %v897 = vunpack.c.l.b16 %v762
      %v898 = vunpack.c.l.b16 %v763
      %v899 = vunpack.c.l.b16 %v764
      %v900 = vunpack.c.l.b16 %v765
      %v901 = vunpack.c.l.b16 %v766
      %v902 = vunpack.c.l.b16 %v767
      %v903 = vunpack.c.l.b16 %v768
      %v904 = vunpack.c.l.b16 %v769
      %v905 = vunpack.c.l.b16 %v770
      %v906 = vunpack.c.l.b16 %v771
      %v907 = vunpack.c.l.b16 %v772
      %v908 = vunpack.c.l.b16 %v773
      %v909 = vunpack.c.l.b16 %v774
      %v910 = vunpack.c.l.b16 %v775
      %v911 = vunpack.c.l.b16 %v776
      %v912 = vunpack.c.l.b16 %v777
      %v913 = vunpack.c.l.b16 %v778
      %v914 = vunpack.c.l.b16 %v779
      %v915 = vunpack.c.l.b16 %v780
      %v916 = vunpack.c.l.b16 %v781
      %v917 = vunpack.c.l.b16 %v782
      %v918 = vunpack.c.l.b16 %v783
      %v919 = vunpack.c.l.b16 %v784
      %v920 = vunpack.c.l.b16 %v785
      %v921 = vunpack.c.l.b16 %v786
      %v922 = vunpack.c.l.b16 %v787
      %v923 = vunpack.c.l.b16 %v788
      %v924 = vunpack.c.l.b16 %v789
      %v925 = vunpack.c.l.b16 %v790
      %v926 = vunpack.c.l.b16 %v791
      %v927 = vunpack.c.l.b16 %v792
      %v928 = vunpack.c.l.b16 %v793
      %v929 = vunpack.c.l.b16 %v794
      %v930 = vunpack.c.l.b16 %v795
      %v931 = vunpack.c.l.b16 %v796
      %v932 = vunpack.c.l.b16 %v797
      %v933 = vunpack.c.l.b16 %v798
      %v934 = vunpack.c.l.b16 %v799
      %v935 = vunpack.c.l.b16 %v800
      %v936 = vunpack.c.l.b16 %v801
      %v937 = vunpack.c.l.b16 %v802
      %v938 = vunpack.c.l.b16 %v803
      %v939 = vunpack.c.l.b16 %v804
      %v940 = vunpack.c.l.b16 %v805
      %v941 = vpack.c.b16 %v878, %v877
      %v942 = vpack.c.b16 %v880, %v879
      %v943 = vpack.c.b16 %v882, %v881
      %v944 = vpack.c.b16 %v884, %v883
      %v945 = vpack.c.b16 %v886, %v885
      %v946 = vpack.c.b16 %v888, %v887
      %v947 = vpack.c.b16 %v890, %v889
      %v948 = vpack.c.b16 %v892, %v891
      %v949 = vpack.c.b16 %v894, %v893
      %v950 = vpack.c.b16 %v896, %v895
      %v951 = vpack.c.b16 %v898, %v897
      %v952 = vpack.c.b16 %v900, %v899
      %v953 = vpack.c.b16 %v902, %v901
      %v954 = vpack.c.b16 %v904, %v903
      %v955 = vpack.c.b16 %v906, %v905
      %v956 = vpack.c.b16 %v908, %v907
      %v957 = vpack.c.b16 %v910, %v909
      %v958 = vpack.c.b16 %v912, %v911
      %v959 = vpack.c.b16 %v914, %v913
      %v960 = vpack.c.b16 %v916, %v915
      %v961 = vpack.c.b16 %v918, %v917
      %v962 = vpack.c.b16 %v920, %v919
      %v963 = vpack.c.b16 %v922, %v921
      %v964 = vpack.c.b16 %v924, %v923
      %v965 = vpack.c.b16 %v926, %v925
      %v966 = vpack.c.b16 %v928, %v927
      %v967 = vpack.c.b16 %v930, %v929
      %v968 = vpack.c.b16 %v932, %v931
      %v969 = vpack.c.b16 %v934, %v933
      %v970 = vpack.c.b16 %v936, %v935
      %v971 = vpack.c.b16 %v938, %v937
      %v972 = vpack.c.b16 %v940, %v939
      %1005 = vmatprep.subr.bf16.mxu0 0
      %1006 = vmatpush1.bf16.msra.mxu0 %v941
      %1007 = vmatprep.subr.bf16.mxu0 0
      %1008 = vmatpush1.bf16.msra.mxu0 %v942
      %1009 = vmatprep.subr.bf16.mxu0 0
      %1010 = vmatpush1.bf16.msra.mxu0 %v943
      %1011 = vmatprep.subr.bf16.mxu0 0
      %1012 = vmatpush1.bf16.msra.mxu0 %v944
      %1013 = vmatprep.subr.bf16.mxu0 0
      %1014 = vmatpush1.bf16.msra.mxu0 %v945
      %1015 = vmatprep.subr.bf16.mxu0 0
      %1016 = vmatpush1.bf16.msra.mxu0 %v946
      %1017 = vmatprep.subr.bf16.mxu0 0
      %1018 = vmatpush1.bf16.msra.mxu0 %v947
      %1019 = vmatprep.subr.bf16.mxu0 0
      %1020 = vmatpush1.bf16.msra.mxu0 %v948
      %1021 = vmatprep.subr.bf16.mxu0 0
      %1022 = vmatpush1.bf16.msra.mxu0 %v949
      %1023 = vmatprep.subr.bf16.mxu0 0
      %1024 = vmatpush1.bf16.msra.mxu0 %v950
      %1025 = vmatprep.subr.bf16.mxu0 0
      %1026 = vmatpush1.bf16.msra.mxu0 %v951
      %1027 = vmatprep.subr.bf16.mxu0 0
      %1028 = vmatpush1.bf16.msra.mxu0 %v952
      %1029 = vmatprep.subr.bf16.mxu0 0
      %1030 = vmatpush1.bf16.msra.mxu0 %v953
      %1031 = vmatprep.subr.bf16.mxu0 0
      %1032 = vmatpush1.bf16.msra.mxu0 %v954
      %1033 = vmatprep.subr.bf16.mxu0 0
      %1034 = vmatpush1.bf16.msra.mxu0 %v955
      %1035 = vmatprep.subr.bf16.mxu0 0
      %1036 = vmatpush1.bf16.msra.mxu0 %v956
      %1037 = vmatprep.mubr.bf16.mxu0 %v739
      %1038 = vmatmul.mubr.bf16.gmra.mrb[0].mxu0 %v738
      %v1039 = vpop.f32.mrb[0].mxu0
      %v1040 = vadd.f32 %v811, %v1039
      %v1041 = vpop.f32.mrb[0].mxu0
      %v1042 = vpop.f32.mrb[0].mxu0
      %v1043 = vadd.f32 %v811, %v1042
      %v1044 = vpop.f32.mrb[0].mxu0
      %1045 = vdwg.mxu0
      %1046 = vmatprep.subr.bf16.mxu0 0
      %1047 = vmatpush1.bf16.msra.mxu0 %v957
      %1048 = vmatprep.subr.bf16.mxu0 0
      %1049 = vmatpush1.bf16.msra.mxu0 %v958
      %1050 = vmatprep.subr.bf16.mxu0 0
      %1051 = vmatpush1.bf16.msra.mxu0 %v959
      %1052 = vmatprep.subr.bf16.mxu0 0
      %1053 = vmatpush1.bf16.msra.mxu0 %v960
      %1054 = vmatprep.subr.bf16.mxu0 0
      %1055 = vmatpush1.bf16.msra.mxu0 %v961
      %1056 = vmatprep.subr.bf16.mxu0 0
      %1057 = vmatpush1.bf16.msra.mxu0 %v962
      %1058 = vmatprep.subr.bf16.mxu0 0
      %1059 = vmatpush1.bf16.msra.mxu0 %v963
      %1060 = vmatprep.subr.bf16.mxu0 0
      %1061 = vmatpush1.bf16.msra.mxu0 %v964
      %1062 = vmatprep.subr.bf16.mxu0 0
      %1063 = vmatpush1.bf16.msra.mxu0 %v965
      %1064 = vmatprep.subr.bf16.mxu0 0
      %1065 = vmatpush1.bf16.msra.mxu0 %v966
      %1066 = vmatprep.subr.bf16.mxu0 0
      %1067 = vmatpush1.bf16.msra.mxu0 %v967
      %1068 = vmatprep.subr.bf16.mxu0 0
      %1069 = vmatpush1.bf16.msra.mxu0 %v968
      %1070 = vmatprep.subr.bf16.mxu0 0
      %1071 = vmatpush1.bf16.msra.mxu0 %v969
      %1072 = vmatprep.subr.bf16.mxu0 0
      %1073 = vmatpush1.bf16.msra.mxu0 %v970
      %1074 = vmatprep.subr.bf16.mxu0 0
      %1075 = vmatpush1.bf16.msra.mxu0 %v971
      %1076 = vmatprep.subr.bf16.mxu0 0
      %1077 = vmatpush1.bf16.msra.mxu0 %v972
      %1078 = vmatprep.mubr.bf16.mxu0 %v741
      %1079 = vmatmul.mubr.bf16.gmra.mrb[0].mxu0 %v740
      %v1080 = vpop.f32.mrb[0].mxu0
      %v1081 = vadd.f32 %v1040, %v1080
      %v1082 = vpop.f32.mrb[0].mxu0
      %v1083 = vpop.f32.mrb[0].mxu0
      %v1084 = vadd.f32 %v1043, %v1083
      %v1085 = vpop.f32.mrb[0].mxu0
      %1086 = vdwg.mxu0
      %v1087 = vtanh.pop %v1081
      %v1088 = vtanh.pop %v1084
      %v1089 = vmul.f32 %v1087, 10.0
      %v1090 = vmul.f32 %v1088, 10.0
      %1091 = vst [vmem:[%s229] sm:$0xff] %v1089
      %1092 = vst [vmem:[%s229 + $0x8] sm:$0xff] %v1090
      %s1093 = smul.u32 2, %s16
      %p1094 = scmp.lt.s32.totalorder %s1093, 3
      %s1095 = scalar_select %p1094, %s1093, 3
      %s1096 = smul.addr %s1095, 8
      %s1097 = scalar_lea.vmem %s5, %s1096
      // Predicated region
      $region41: #{encoder_meta_forward.1} parent=39 // pred_check
        %p1098 = pneg %p144
      $region42: #{encoder_meta_forward.1} parent=39 // pred_check_branch
        %1100 = sbr.rel (%p1098) target = $region44
      $region43: #{encoder_meta_forward.1} parent=39 // pred_region
        %s1101 = smul.u32 2, %s16
      $region44: #{encoder_meta_forward.1} parent=39 // pred_fallthru
        _
    $region40: #{encoder_meta_forward.1} parent=5 // pred_fallthru
      _
    %p1102 = scmp.le.s32.totalorder 2, %s11
    // Predicated region
    $region45: #{encoder_meta_forward.1} parent=5 // pred_check
      %p1103 = pneg %p1102
    $region46: #{encoder_meta_forward.1} parent=5 // pred_check_branch
      %1105 = sbr.rel (%p1103) target = $region48
    $region47: #{encoder_meta_forward.1} parent=5 // pred_region
      %s1106 = ssub.s32 %s11, 2
      // Predicated region
      $region49: #{encoder_meta_forward.1} parent=47 // pred_check
        %p1107 = pneg %p150
      $region50: #{encoder_meta_forward.1} parent=47 // pred_check_branch
        %1109 = sbr.rel (%p1107) target = $region52
      $region51: #{encoder_meta_forward.1} parent=47 // pred_region
        %s1110 = smul.u32 2, %s17
        %p1111 = scmp.lt.s32.totalorder %s1110, 3
        %s1112 = scalar_select %p1111, %s1110, 3
        %s1113 = smul.addr %s1112, 8
        %s1114 = scalar_lea.vmem %s5, %s1113
      $region52: #{encoder_meta_forward.1} parent=47 // pred_fallthru
        _
    $region48: #{encoder_meta_forward.1} parent=5 // pred_fallthru
      _
  $region6: #{encoder_meta_forward.1} parent=0 // loop_footer
    %s15 = sadd.s32 1, %s11
  $region7: #{encoder_meta_forward.1} parent=0 // loop_footer_branch
    %10 = sbr.rel target = $region3
  $region8: #{encoder_meta_forward.1} parent=0 // loop_exit
    _

</llo_original>
